<compile_context>
chip_gen: v7x
topology: tpu7x:2x2x1
jax: 0.10.0
libtpu: 0.0.40
codegen_flags: <defaults>
</compile_context>

<pallas_src>
import functools
from typing import NamedTuple

import jax
import jax.numpy as jnp
from jax.experimental import pallas as pl
from jax.experimental.pallas import tpu as pltpu


# ----------------------------------------------------------------------------- helpers
def _round_up(a: int, b: int) -> int:
    return ((a + b - 1) // b) * b


def _is_sub32(dtype) -> bool:
    return jnp.dtype(dtype).itemsize < 4


def _tpu_generation_info():
    """Return (vmem_capacity_bytes, is_v7x_like).  Conservative fallback if query fails."""
    try:
        vmem = int(pltpu.get_tpu_info().vmem_capacity_bytes)
    except Exception:
        vmem = 64 * 1024 * 1024  # conservative (v7x-sized) fallback: safe everywhere
    is_v7x_like = vmem <= 80 * 1024 * 1024
    return vmem, is_v7x_like


def _default_tiles(mm_dtype, is_v7x_like):
    """(tile_m, tile_i) defaults per generation / operand dtype."""
    f32_operands = not _is_sub32(mm_dtype)
    if is_v7x_like:
        # 64 MiB physical VMEM: keep double-buffered blocks + gu/p temps well under ~56 MiB.
        return (256, 256) if f32_operands else (256, 512)
    # v5e / v6e: 128 MiB VMEM; a bigger tm halves how often weights are re-streamed.
    return (256, 512) if f32_operands else (512, 512)


# ----------------------------------------------------------------------------- kernel
def _mlp_body(x_ref, wgu_ref, wd_ref, out_ref, post_ref, acc_ref):
    """Grid = (M tiles [parallel], I tiles [reduction, innermost]).

    x_ref:    (TM, H)       token tile (resident across the I axis)
    wgu_ref:  (H, 2*TI)     fused [gate_j | up_j] weight tile
    wd_ref:   (TI, H)       down_proj weight tile
    out_ref:  (TM, H)       output tile, resident across the I axis (accumulator)
    post_ref: (TM, TI)      post-activation tile (written every step)
    acc_ref:  (TM, H) f32   accumulator; aliased to out_ref when the output is f32
    """
    j = pl.program_id(1)

    @pl.when(j == 0)
    def _():
        acc_ref[...] = jnp.zeros_like(acc_ref)

    ti = post_ref.shape[-1]
    x = x_ref[...]
    gu = jnp.dot(x, wgu_ref[...], preferred_element_type=jnp.float32)
    g = gu[:, :ti]
    u = gu[:, ti:]
    p = (g * jax.nn.sigmoid(g)) * u  # SwiGLU "post activation" (f32 elementwise, EUP sigmoid)
    post_ref[...] = p.astype(post_ref.dtype)

    acc_ref[...] += jnp.dot(p.astype(wd_ref.dtype), wd_ref[...],
                            preferred_element_type=jnp.float32).astype(acc_ref.dtype)

    if acc_ref is not out_ref:  # trace-time branch
        @pl.when(j == pl.num_programs(1) - 1)
        def _():
            out_ref[...] = acc_ref[...].astype(out_ref.dtype)


def _mlp_kernel_acc_in_out(x_ref, wgu_ref, wd_ref, out_ref, post_ref):
    # f32 output: accumulate directly in the VMEM-resident output block (no scratch copy).
    _mlp_body(x_ref, wgu_ref, wd_ref, out_ref, post_ref, out_ref)


def _mlp_kernel_with_scratch(x_ref, wgu_ref, wd_ref, out_ref, post_ref, acc_ref):
    _mlp_body(x_ref, wgu_ref, wd_ref, out_ref, post_ref, acc_ref)


# ----------------------------------------------------------------------------- weight prep
class PreparedMLPWeights(NamedTuple):
    wgu: jax.Array  # (H, 2*i_pad); column block j (width 2*ti) = [gate_j | up_j]
    wd: jax.Array   # (i_pad, H)
    I: int          # original intermediate size
    ti: int         # intermediate tile size baked into the interleave


def prepare_mlp_weights(wg_t, wu_t, wd_t, *, tile_i=None, matmul_dtype=jnp.bfloat16):
    """One-time weight preparation (call at weight-load time, NOT per forward).

    wg_t / wu_t: (H, I)   gate_proj / up_proj weights, already transposed from
                          PyTorch nn.Linear's (out_features, in_features) layout.
    wd_t:        (I, H)   down_proj weight, already transposed.
    """
    H, I = wg_t.shape
    mm_dtype = jnp.dtype(matmul_dtype)

    _, is_v7x_like = _tpu_generation_info()
    if tile_i is None:
        tile_i = _default_tiles(mm_dtype, is_v7x_like)[1]
    tile_i = max(128, (int(tile_i) // 128) * 128)          # lane-dense: multiple of 128
    ti = min(tile_i, _round_up(I, 128))
    i_pad = _round_up(I, ti)
    n_i = i_pad // ti

    def pad_cols(w):
        return w if i_pad == I else jnp.pad(w, ((0, 0), (0, i_pad - I)))

    wg_p = pad_cols(wg_t).astype(mm_dtype)
    wu_p = pad_cols(wu_t).astype(mm_dtype)
    wd_p = wd_t if i_pad == I else jnp.pad(wd_t, ((0, i_pad - I), (0, 0)))
    wd_p = wd_p.astype(mm_dtype)

    # Fuse gate/up per intermediate tile: column block j of width 2*ti = [gate_j | up_j],
    # so each grid step issues ONE wide MXU matmul for both projections.
    wgu = jnp.concatenate(
        [wg_p.reshape(H, n_i, ti), wu_p.reshape(H, n_i, ti)], axis=-1
    ).reshape(H, 2 * i_pad)

    return PreparedMLPWeights(wgu=wgu, wd=wd_p, I=I, ti=ti)


# ----------------------------------------------------------------------------- forward
@functools.partial(jax.jit,
                   static_argnames=("I", "ti", "tile_m", "out_dtype", "post_dtype"))
def mlp_forward(x, wgu, wd, *, I, ti, tile_m=None, out_dtype=None,
                post_dtype=jnp.bfloat16):
    """Hot path.  x: (B, S, H); wgu/wd from prepare_mlp_weights.

    Returns (output (B,S,H) in out_dtype (default x.dtype),
             post_activation (B,S,I) in post_dtype (default bf16)).
    """
    B, S, H = x.shape
    M = B * S
    i_pad, _ = wd.shape
    n_i = i_pad // ti
    mm_dtype = wgu.dtype

    out_dtype = jnp.dtype(x.dtype) if out_dtype is None else jnp.dtype(out_dtype)
    post_dtype = jnp.dtype(x.dtype) if post_dtype is None else jnp.dtype(post_dtype)

    _, is_v7x_like = _tpu_generation_info()
    if tile_m is None:
        tile_m = _default_tiles(mm_dtype, is_v7x_like)[0]

    # Sub-32-bit dtypes pack rows along sublanes -> round tm to 16; pure f32 -> 8.
    sub32 = _is_sub32(mm_dtype) or _is_sub32(post_dtype) or _is_sub32(out_dtype)
    row_align = 16 if sub32 else 8
    tile_m = max(row_align, (int(tile_m) // row_align) * row_align)
    tm = min(tile_m, _round_up(M, row_align))
    # v7x megacore: if everything fits one M tile, split into >=2 so both TCs work.
    if is_v7x_like and tm >= M and M >= 2 * row_align:
        tm = min(tm, _round_up(-(-M // 2), row_align))

    m_pad = _round_up(M, tm)
    n_m = m_pad // tm

    x2 = x.reshape(M, H)
    if x2.dtype != mm_dtype:
        x2 = x2.astype(mm_dtype)
    if m_pad != M:                                   # skip pad on the exact-multiple path
        x2 = jnp.pad(x2, ((0, m_pad - M), (0, 0)))

    acc_in_out = out_dtype == jnp.dtype(jnp.float32)
    kernel = _mlp_kernel_acc_in_out if acc_in_out else _mlp_kernel_with_scratch
    scratch = [] if acc_in_out else [pltpu.VMEM((tm, H), jnp.float32)]

    # Generation-aware scoped-VMEM limit: headroom on v7x (64 MiB phys), roomy on v5e/v6e.
    vmem_limit = (56 if is_v7x_like else 100) * 1024 * 1024

    out2, post2 = pl.pallas_call(
        kernel,
        out_shape=(
            jax.ShapeDtypeStruct((m_pad, H), out_dtype),
            jax.ShapeDtypeStruct((m_pad, i_pad), post_dtype),
        ),
        grid_spec=pltpu.PrefetchScalarGridSpec(
            num_scalar_prefetch=0,
            grid=(n_m, n_i),
            in_specs=[
                pl.BlockSpec((tm, H), lambda i, j: (i, 0)),       # x tile (resident over j)
                pl.BlockSpec((H, 2 * ti), lambda i, j: (0, j)),   # fused gate|up weight tile
                pl.BlockSpec((ti, H), lambda i, j: (j, 0)),       # down_proj weight tile
            ],
            out_specs=[
                pl.BlockSpec((tm, H), lambda i, j: (i, 0)),       # output (accumulated over j)
                pl.BlockSpec((tm, ti), lambda i, j: (i, j)),      # post_activation tile
            ],
            scratch_shapes=scratch,
        ),
        compiler_params=pltpu.CompilerParams(
            # M axis shards across TensorCores (v7x megacore); I axis is the reduction.
            dimension_semantics=("parallel", "arbitrary"),
            vmem_limit_bytes=vmem_limit,
        ),
    )(x2, wgu, wd)

    out = out2 if m_pad == M else out2[:M]
    out = out.reshape(B, S, H)
    post = post2 if (m_pad == M and i_pad == I) else post2[:M, :I]
    post = post.reshape(B, S, I)
    return out, post


def mlp_forward_from_torch_weights(x, wg_t, wu_t, wd_t, *, tile_m=None, tile_i=None,
                                   matmul_dtype=jnp.bfloat16, post_dtype=jnp.bfloat16,
                                   out_dtype=None):
    """Convenience wrapper (tests / one-off use).  For inference, call
    prepare_mlp_weights ONCE at weight-load time and reuse the result."""
    prep = prepare_mlp_weights(wg_t, wu_t, wd_t, tile_i=tile_i, matmul_dtype=matmul_dtype)
    return mlp_forward(x, prep.wgu, prep.wd, I=prep.I, ti=prep.ti, tile_m=tile_m,
                       out_dtype=out_dtype, post_dtype=post_dtype)


def apply_neuron_interventions(output, neuron_interventions):
    """output[:, :, neuron_idx] = mean, mirroring MLPWrapper's intervention loop
    (batched into a single scatter instead of one .at[].set per neuron)."""
    if len(neuron_interventions) > 0:
        print("performing intervention: mlp_neuron_interventions")
        idx = jnp.asarray(list(neuron_interventions.keys()), dtype=jnp.int32)
        vals = jnp.asarray(list(neuron_interventions.values()), dtype=output.dtype)
        output = output.at[:, :, idx].set(vals)
    return output


# ----------------------------------------------------------------------------- test
if __name__ == "__main__":
    # Small LLaMA-ish MLP dims (kept (8,128)-aligned for TPU tiling).
    B, S, H, I = 2, 8, 128, 256
    key = jax.random.PRNGKey(0)
    kx, kg, ku, kd = jax.random.split(key, 4)

    x = jax.random.normal(kx, (B, S, H), dtype=jnp.float32)
    # Deterministic weights in PyTorch nn.Linear layout (out_features, in_features), no bias.
    wg = jax.random.normal(kg, (I, H), dtype=jnp.float32) * 0.02  # gate_proj.weight
    wu = jax.random.normal(ku, (I, H), dtype=jnp.float32) * 0.02  # up_proj.weight
    wd = jax.random.normal(kd, (H, I), dtype=jnp.float32) * 0.02  # down_proj.weight

    # Pure-JAX reference of the SwiGLU MLP semantics.
    g_ref = x @ wg.T
    post_ref = (g_ref * jax.nn.sigmoid(g_ref)) * (x @ wu.T)
    out_ref = post_ref @ wd.T

    # 1) f32 end-to-end (explicit opt-in), weights prepared once and reused.
    prep_f32 = prepare_mlp_weights(wg.T, wu.T, wd.T, matmul_dtype=jnp.float32)
    out, post = mlp_forward(x, prep_f32.wgu, prep_f32.wd, I=prep_f32.I, ti=prep_f32.ti,
                            post_dtype=jnp.float32)
    out = apply_neuron_interventions(out, {})  # no interventions registered by default
    jax.block_until_ready((out, post))
    assert jnp.allclose(out, out_ref, atol=1e-4, rtol=1e-4)
    assert jnp.allclose(post, post_ref, atol=1e-4, rtol=1e-4)

    # 2) Forced multi-tile grid: exercises M tiling and the I-axis accumulation path.
    out2, post2 = mlp_forward_from_torch_weights(
        x, wg.T, wu.T, wd.T, tile_m=16, tile_i=128,
        matmul_dtype=jnp.float32, post_dtype=jnp.float32)
    jax.block_until_ready((out2, post2))
    assert jnp.allclose(out2, out_ref, atol=1e-4, rtol=1e-4)
    assert jnp.allclose(post2, post_ref, atol=1e-4, rtol=1e-4)

    # 3) Ragged token count (M not a multiple of the tile): exercises the padding path.
    x3 = x[:1, :5]
    out3, post3 = mlp_forward_from_torch_weights(
        x3, wg.T, wu.T, wd.T, tile_m=8, tile_i=128,
        matmul_dtype=jnp.float32, post_dtype=jnp.float32)
    jax.block_until_ready((out3, post3))
    assert jnp.allclose(out3, out_ref[:1, :5], atol=1e-4, rtol=1e-4)
    assert jnp.allclose(post3, post_ref[:1, :5], atol=1e-4, rtol=1e-4)

    # 4) Default mixed-precision path: bf16 MXU operands + bf16 post, f32 accumulation.
    prep_bf16 = prepare_mlp_weights(wg.T, wu.T, wd.T)           # bf16 by default
    out4, post4 = mlp_forward(x, prep_bf16.wgu, prep_bf16.wd,
                              I=prep_bf16.I, ti=prep_bf16.ti)   # post bf16 by default
    jax.block_until_ready((out4, post4))
    assert jnp.allclose(out4, out_ref, atol=3e-2, rtol=3e-2)
    assert jnp.allclose(post4.astype(jnp.float32), post_ref, atol=3e-2, rtol=3e-2)

    print("KERNEL_OK")
</pallas_src>

<mosaic_0001>
module attributes {stable_mosaic.version = 11 : i64} {
  func.func @_mlp_kernel_acc_in_out(%arg0: i32, %arg1: i32, %arg2: memref<8x128xf32, #tpu.memory_space<vmem>>, %arg3: memref<128x512xf32, #tpu.memory_space<vmem>>, %arg4: memref<256x128xf32, #tpu.memory_space<vmem>>, %arg5: memref<8x128xf32, #tpu.memory_space<vmem>>, %arg6: memref<8x256xf32, #tpu.memory_space<vmem>>) attributes {dimension_semantics = [#tpu.dimension_semantics<parallel>, #tpu.dimension_semantics<arbitrary>], iteration_bounds = array<i64: 2, 1>, scalar_prefetch = 0 : i64, scratch_operands = 0 : i64, tpu.core_type = #tpu.core_type<tc>, window_params = [{transform_indices = @transform_0, window_bounds = array<i64: 8, 128>}, {transform_indices = @transform_1, window_bounds = array<i64: 128, 512>}, {transform_indices = @transform_2, window_bounds = array<i64: 256, 128>}, {transform_indices = @transform_3, window_bounds = array<i64: 8, 128>}, {transform_indices = @transform_4, window_bounds = array<i64: 8, 256>}]} {
    %c0_i32 = arith.constant 0 : i32
    %0 = arith.cmpi eq, %arg1, %c0_i32 : i32
    %1 = arith.extui %0 : i1 to i32
    %c0_i32_0 = arith.constant 0 : i32
    %2 = arith.cmpi ne, %1, %c0_i32_0 : i32
    scf.if %2 {
      %cst_14 = arith.constant 0.000000e+00 : f32
      %21 = vector.broadcast %cst_14 : f32 to vector<8x128xf32>
      %c0_15 = arith.constant 0 : index
      %c0_16 = arith.constant 0 : index
      %22 = vector.load %arg5[%c0_15, %c0_16] : memref<8x128xf32, #tpu.memory_space<vmem>>, vector<8x128xf32>
      tpu.vector_store %arg5[%c0_15, %c0_16], %21 {strides = array<i32>} : memref<8x128xf32, #tpu.memory_space<vmem>>, vector<8x128xf32>,
    } else {
    }
    %c0 = arith.constant 0 : index
    %c0_1 = arith.constant 0 : index
    %3 = vector.load %arg2[%c0, %c0_1] : memref<8x128xf32, #tpu.memory_space<vmem>>, vector<8x128xf32>
    %c0_2 = arith.constant 0 : index
    %c0_3 = arith.constant 0 : index
    %4 = vector.load %arg3[%c0_2, %c0_3] : memref<128x512xf32, #tpu.memory_space<vmem>>, vector<128x512xf32>
    %cst = arith.constant dense<0.000000e+00> : vector<8x512xf32>
    %5 = tpu.matmul %3, %4, %cst {dimension_numbers = #tpu.dot_dimension_numbers<[1], [0], [0], [1], [0, 0, 1, 1], [], []>} : vector<8x128xf32>, vector<128x512xf32>, vector<8x512xf32> -> vector<8x512xf32>
    %6 = vector.extract_strided_slice %5 {offsets = [0, 0], sizes = [8, 256], strides = [1, 1]} : vector<8x512xf32> to vector<8x256xf32>
    %7 = vector.extract_strided_slice %5 {offsets = [0, 256], sizes = [8, 256], strides = [1, 1]} : vector<8x512xf32> to vector<8x256xf32>
    %8 = arith.negf %6 : vector<8x256xf32>
    %9 = math.exp %8 : vector<8x256xf32>
    %cst_4 = arith.constant 1.000000e+00 : f32
    %10 = vector.broadcast %cst_4 : f32 to vector<8x256xf32>
    %11 = arith.addf %10, %9 : vector<8x256xf32>
    %12 = arith.divf %10, %11 : vector<8x256xf32>
    %13 = arith.mulf %6, %12 : vector<8x256xf32>
    %14 = arith.mulf %13, %7 : vector<8x256xf32>
    %c0_5 = arith.constant 0 : index
    %c0_6 = arith.constant 0 : index
    %15 = vector.load %arg6[%c0_5, %c0_6] : memref<8x256xf32, #tpu.memory_space<vmem>>, vector<8x256xf32>
    tpu.vector_store %arg6[%c0_5, %c0_6], %14 {strides = array<i32>} : memref<8x256xf32, #tpu.memory_space<vmem>>, vector<8x256xf32>,
    %c0_7 = arith.constant 0 : index
    %c0_8 = arith.constant 0 : index
    %16 = vector.load %arg5[%c0_7, %c0_8] : memref<8x128xf32, #tpu.memory_space<vmem>>, vector<8x128xf32>
    %c0_9 = arith.constant 0 : index
    %c0_10 = arith.constant 0 : index
    %17 = vector.load %arg4[%c0_9, %c0_10] : memref<256x128xf32, #tpu.memory_space<vmem>>, vector<256x128xf32>
    %cst_11 = arith.constant dense<0.000000e+00> : vector<8x128xf32>
    %18 = tpu.matmul %14, %17, %cst_11 {dimension_numbers = #tpu.dot_dimension_numbers<[1], [0], [0], [1], [0, 0, 1, 1], [], []>} : vector<8x256xf32>, vector<256x128xf32>, vector<8x128xf32> -> vector<8x128xf32>
    %19 = arith.addf %16, %18 : vector<8x128xf32>
    %c0_12 = arith.constant 0 : index
    %c0_13 = arith.constant 0 : index
    %20 = vector.load %arg5[%c0_12, %c0_13] : memref<8x128xf32, #tpu.memory_space<vmem>>, vector<8x128xf32>
    tpu.vector_store %arg5[%c0_12, %c0_13], %19 {strides = array<i32>} : memref<8x128xf32, #tpu.memory_space<vmem>>, vector<8x128xf32>,
    return
  }
  func.func @transform_0(%arg0: i32, %arg1: i32) -> (i32, i32) {
    %c0_i32 = arith.constant 0 : i32
    %c0_i32_0 = arith.constant 0 : i32
    return %arg0, %c0_i32 : i32, i32
  }
  func.func @transform_1(%arg0: i32, %arg1: i32) -> (i32, i32) {
    %c0_i32 = arith.constant 0 : i32
    %c0_i32_0 = arith.constant 0 : i32
    return %c0_i32, %arg1 : i32, i32
  }
  func.func @transform_2(%arg0: i32, %arg1: i32) -> (i32, i32) {
    %c0_i32 = arith.constant 0 : i32
    %c0_i32_0 = arith.constant 0 : i32
    return %arg1, %c0_i32 : i32, i32
  }
  func.func @transform_3(%arg0: i32, %arg1: i32) -> (i32, i32) {
    %c0_i32 = arith.constant 0 : i32
    %c0_i32_0 = arith.constant 0 : i32
    return %arg0, %c0_i32 : i32, i32
  }
  func.func @transform_4(%arg0: i32, %arg1: i32) -> (i32, i32) {
    %c0_i32 = arith.constant 0 : i32
    return %arg0, %arg1 : i32, i32
  }
}

</mosaic_0001>

<llo_original>
// kernel: mlp_forward.1
$region0: #{mlp_forward.1}
  #allocation0 [shape = 'u32[]', space=smem, size = 0x4, offset = 0x4, fixed_abs, tag = 'smem constant byte address 0x4 - core index']
  #allocation1 [shape = 'u32[144,128]{1,0:T(1,128)}', space=vmem, size = 0x12000, scoped, tag = 'internal scratch']
  %s0 = inlined_call_operand.hbm [shape: f32[16,128], index: 0, kind: input, shape index: {}]
  %s1 = inlined_call_operand.hbm [shape: f32[128,512], index: 1, kind: input, shape index: {}]
  %s2 = inlined_call_operand.hbm [shape: f32[256,128], index: 2, kind: input, shape index: {}]
  %s3 = inlined_call_operand.hbm [shape: f32[16,128], index: 3, kind: output, shape index: {0}]
  %s4 = inlined_call_operand.hbm [shape: f32[16,256], index: 4, kind: output, shape index: {1}]
  %5 = xla_tuple %s3, %s4
  %s6 = sld [smem:[#allocation0]]
  $region69: #{mlp_forward.1} parent=0
    _
  %s8 = ssub.s32 1, %s6
  %s9 = scalar_select 0, %s8, %s6
  $region1: #{mlp_forward.1} parent=0
    #allocation2 [shape = 'u8[8192]{0}', space=vmem, size = 0x2000, scoped, tag = 'input window, operand 0']
    #allocation3 [shape = 's32[2]{0}', space=sflag, size = 0x8, scoped, tag = 'scoped memory for mlp_forward.1']
    #allocation4 [shape = 's32[2]{0}', space=sflag, size = 0x8, scoped, tag = 'scoped memory for mlp_forward.1']
    #allocation5 [shape = 'u8[262144]{0}', space=vmem, size = 0x40000, scoped, tag = 'input window, operand 1, single buffered']
    #allocation6 [shape = 's32[1]{0}', space=sflag, size = 0x4, scoped, tag = 'scoped memory for mlp_forward.1']
    #allocation7 [shape = 'u8[131072]{0}', space=vmem, size = 0x20000, scoped, tag = 'input window, operand 2, single buffered']
    #allocation8 [shape = 'u8[8192]{0}', space=vmem, size = 0x2000, scoped, tag = 'output window, operand 0']
    #allocation9 [shape = 'u8[16384]{0}', space=vmem, size = 0x4000, scoped, tag = 'output window, operand 1']
    #allocation10 [shape = 's32[2]{0}', space=sflag, size = 0x8, scoped, tag = 'scoped memory for mlp_forward.1']
    %10 = vsyncpa [#allocation3], 0
    %s11 = scalar_lea.sflag [#allocation3], 1
    %12 = vsyncpa %s11, 0
    %13 = vsyncpa [#allocation6], 0
    %14 = vsyncpa [#allocation4], 0
    %s15 = scalar_lea.sflag [#allocation4], 1
    %16 = vsyncpa %s15, 0
    %17 = vsyncpa [#allocation10], 0
    %s18 = scalar_lea.sflag [#allocation10], 1
    %19 = vsyncpa %s18, 0
    loop: start=0, step=1, limit=4
    $region2: #{mlp_forward.1} parent=1 // loop_pre_header
      _
    $region3: #{mlp_forward.1} parent=1 // loop_header
      %s21 = sphi 0, %s25
      %p22 = scmp.ge.s32.totalorder %s21, 4
      %s28 = sphi 0, %s40
      %s29 = sphi 0, %s36
      %s30 = sphi 0, %s28
      %s31 = sphi 0, %s29
      %s32 = sphi 0, %s30
      %s33 = sphi 0, %s31
      %s43 = sphi 0, %s45
      %s46 = sphi 0, %s43
      %s47 = sphi 0, %s46
      %s63 = sphi 0, %s47
      %s69 = sphi 0, %s71
      %s72 = sphi 0, %s69
      %s73 = sphi 0, %s72
      %s89 = sphi 0, %s73
      %s95 = sphi 0, %s97
      %s98 = sphi 0, %s95
      %s99 = sphi 0, %s98
      %s115 = sphi 0, %s99
      %s121 = sphi 0, %s123
      %s124 = sphi 0, %s121
      %s125 = sphi 0, %s124
      %s141 = sphi 0, %s125
      %s149 = sphi 0, %s151
      %s152 = sphi 0, %s149
      %s153 = sphi 0, %s152
      %s169 = sphi 0, %s153
    $region4: #{mlp_forward.1} parent=1 // loop_header_branch
      %24 = sbr.rel (%p22) target = $region8
    $region5: #{mlp_forward.1} parent=1 // loop_body
      %s26 = ssub.s32 %s21, 1
      %s27 = ssub.s32 %s21, 2
      %s34 = sadd.s32 1, %s29
      %p35 = scmp.ge.s32.totalorder %s34, 1
      %s36 = scalar_select %p35, 0, %s34
      %s37 = sadd.s32 1, %s28
      %s38 = scalar_select %p35, %s37, %s28
      %p39 = scmp.ge.s32.totalorder %s38, 2
      %s40 = scalar_select %p39, 0, %s38
      %s41 = ssub.s32 %s28, %s40
      %p42 = scmp.eq.s32.totalorder %s41, 0
      %s44 = sadd.s32 %s43, 1
      %s45 = scalar_select %p42, %s43, %s44
      %p48 = pneg %p42
      %p49 = scmp.eq.s32.totalorder %s21, 1
      %p50 = por %p48, %p49
      %p51 = scmp.ne.s32.totalorder %s43, %s46
      %p52 = scmp.eq.s32.totalorder %s21, 0
      %p53 = por %p51, %p52
      %p54 = scmp.ne.s32.totalorder %s43, %s46
      %p55 = scmp.eq.s32.totalorder %s26, 1
      %p56 = por %p54, %p55
      %p57 = scmp.ne.s32.totalorder %s46, %s47
      %p58 = scmp.eq.s32.totalorder %s26, 0
      %p59 = por %p57, %p58
      %p60 = scmp.ne.s32.totalorder %s46, %s47
      %p61 = scmp.eq.s32.totalorder %s27, 1
      %p62 = por %p60, %p61
      %p64 = scmp.ne.s32.totalorder %s47, %s63
      %p65 = scmp.eq.s32.totalorder %s27, 0
      %p66 = por %p64, %p65
      %s67 = ssub.s32 %s29, %s36
      %p68 = scmp.eq.s32.totalorder %s67, 0
      %s70 = sadd.s32 %s69, 1
      %s71 = scalar_select %p68, %s69, %s70
      %p74 = pneg %p68
      %p75 = scmp.eq.s32.totalorder %s21, 1
      %p76 = por %p74, %p75
      %p77 = scmp.ne.s32.totalorder %s69, %s72
      %p78 = scmp.eq.s32.totalorder %s21, 0
      %p79 = por %p77, %p78
      %p80 = scmp.ne.s32.totalorder %s69, %s72
      %p81 = scmp.eq.s32.totalorder %s26, 1
      %p82 = por %p80, %p81
      %p83 = scmp.ne.s32.totalorder %s72, %s73
      %p84 = scmp.eq.s32.totalorder %s26, 0
      %p85 = por %p83, %p84
      %p86 = scmp.ne.s32.totalorder %s72, %s73
      %p87 = scmp.eq.s32.totalorder %s27, 1
      %p88 = por %p86, %p87
      %p90 = scmp.ne.s32.totalorder %s73, %s89
      %p91 = scmp.eq.s32.totalorder %s27, 0
      %p92 = por %p90, %p91
      %s93 = ssub.s32 %s29, %s36
      %p94 = scmp.eq.s32.totalorder %s93, 0
      %s96 = sadd.s32 %s95, 1
      %s97 = scalar_select %p94, %s95, %s96
      %p100 = pneg %p94
      %p101 = scmp.eq.s32.totalorder %s21, 1
      %p102 = por %p100, %p101
      %p103 = scmp.ne.s32.totalorder %s95, %s98
      %p104 = scmp.eq.s32.totalorder %s21, 0
      %p105 = por %p103, %p104
      %p106 = scmp.ne.s32.totalorder %s95, %s98
      %p107 = scmp.eq.s32.totalorder %s26, 1
      %p108 = por %p106, %p107
      %p109 = scmp.ne.s32.totalorder %s98, %s99
      %p110 = scmp.eq.s32.totalorder %s26, 0
      %p111 = por %p109, %p110
      %p112 = scmp.ne.s32.totalorder %s98, %s99
      %p113 = scmp.eq.s32.totalorder %s27, 1
      %p114 = por %p112, %p113
      %p116 = scmp.ne.s32.totalorder %s99, %s115
      %p117 = scmp.eq.s32.totalorder %s27, 0
      %p118 = por %p116, %p117
      %s119 = ssub.s32 %s28, %s40
      %p120 = scmp.eq.s32.totalorder %s119, 0
      %s122 = sadd.s32 %s121, 1
      %s123 = scalar_select %p120, %s121, %s122
      %p126 = pneg %p120
      %p127 = scmp.eq.s32.totalorder %s21, 1
      %p128 = por %p126, %p127
      %p129 = scmp.ne.s32.totalorder %s121, %s124
      %p130 = scmp.eq.s32.totalorder %s21, 0
      %p131 = por %p129, %p130
      %p132 = scmp.ne.s32.totalorder %s121, %s124
      %p133 = scmp.eq.s32.totalorder %s26, 1
      %p134 = por %p132, %p133
      %p135 = scmp.ne.s32.totalorder %s124, %s125
      %p136 = scmp.eq.s32.totalorder %s26, 0
      %p137 = por %p135, %p136
      %p138 = scmp.ne.s32.totalorder %s124, %s125
      %p139 = scmp.eq.s32.totalorder %s27, 1
      %p140 = por %p138, %p139
      %p142 = scmp.ne.s32.totalorder %s125, %s141
      %p143 = scmp.eq.s32.totalorder %s27, 0
      %p144 = por %p142, %p143
      %s145 = ssub.s32 %s28, %s40
      %s146 = ssub.s32 %s29, %s36
      %s147 = sor.u32 %s145, %s146
      %p148 = scmp.eq.s32.totalorder %s147, 0
      %s150 = sadd.s32 %s149, 1
      %s151 = scalar_select %p148, %s149, %s150
      %p154 = pneg %p148
      %p155 = scmp.eq.s32.totalorder %s21, 1
      %p156 = por %p154, %p155
      %p157 = scmp.ne.s32.totalorder %s149, %s152
      %p158 = scmp.eq.s32.totalorder %s21, 0
      %p159 = por %p157, %p158
      %p160 = scmp.ne.s32.totalorder %s149, %s152
      %p161 = scmp.eq.s32.totalorder %s26, 1
      %p162 = por %p160, %p161
      %p163 = scmp.ne.s32.totalorder %s152, %s153
      %p164 = scmp.eq.s32.totalorder %s26, 0
      %p165 = por %p163, %p164
      %p166 = scmp.ne.s32.totalorder %s152, %s153
      %p167 = scmp.eq.s32.totalorder %s27, 1
      %p168 = por %p166, %p167
      %p170 = scmp.ne.s32.totalorder %s153, %s169
      %p171 = scmp.eq.s32.totalorder %s27, 0
      %p172 = por %p170, %p171
      %p173 = scmp.le.s32.totalorder 1, %s21
      %p174 = scmp.lt.s32.totalorder %s21, 3
      %p175 = pnand %p173, %p174
      %p176 = pneg %p175
      // Predicated region
      $region9: #{mlp_forward.1} parent=5 // pred_check
        _
      $region10: #{mlp_forward.1} parent=5 // pred_check_branch
        %178 = sbr.rel (%p175) target = $region12
      $region11: #{mlp_forward.1} parent=5 // pred_region
        %s179 = ssub.s32 %s21, 1
        // Predicated region
        $region13: #{mlp_forward.1} parent=11 // pred_check
          %p180 = pneg %p85
        $region14: #{mlp_forward.1} parent=11 // pred_check_branch
          %182 = sbr.rel (%p180) target = $region16
        $region15: #{mlp_forward.1} parent=11 // pred_region
          %s183 = smul.u32 4, %s31
          %s185 = ssub.s32 8192, 8192
          %186 = vsyncadd [#allocation6], %s185
          %s187 = smul.addr %s183, 128
          %s188 = scalar_lea.hbm %s1, %s187
          %s189 = sshll.u32 [#allocation5], 4
          %s190 = int_to_ptr.vmem [resolvable:$true] %s189
          %195 = dma.hbm_to_vmem [thread:$0]  %s188, 8192, %s190, [#allocation6], 512, 512, 32
        $region16: #{mlp_forward.1} parent=11 // pred_fallthru
          _
        // Predicated region
        $region17: #{mlp_forward.1} parent=11 // pred_check
          %p196 = pneg %p111
        $region18: #{mlp_forward.1} parent=11 // pred_check_branch
          %198 = sbr.rel (%p196) target = $region20
        $region19: #{mlp_forward.1} parent=11 // pred_region
          %s199 = smul.u32 32, %s31
          %s201 = ssub.s32 4096, 4096
          %202 = vsyncadd [#allocation6], %s201
          %s203 = smul.addr %s199, 128
          %s204 = scalar_lea.hbm %s2, %s203
          %s205 = sshll.u32 [#allocation7], 4
          %s206 = int_to_ptr.vmem [resolvable:$true] %s205
          %211 = dma.hbm_to_vmem [thread:$0]  %s204, 4096, %s206, [#allocation6], 128, 128, 8
        $region20: #{mlp_forward.1} parent=11 // pred_fallthru
          _
      $region12: #{mlp_forward.1} parent=5 // pred_fallthru
        _
      %p212 = scmp.lt.s32.totalorder %s21, 2
      // Predicated region
      $region21: #{mlp_forward.1} parent=5 // pred_check
        %p213 = pneg %p212
      $region22: #{mlp_forward.1} parent=5 // pred_check_branch
        %215 = sbr.rel (%p213) target = $region24
      $region23: #{mlp_forward.1} parent=5 // pred_region
        // Predicated region
        $region25: #{mlp_forward.1} parent=23 // pred_check
          %p216 = pneg %p53
        $region26: #{mlp_forward.1} parent=23 // pred_check_branch
          %218 = sbr.rel (%p216) target = $region28
        $region27: #{mlp_forward.1} parent=23 // pred_region
          %s219 = sand.u32 %s43, 1
          %s220 = scalar_lea.sflag [#allocation3], %s219
          %s221 = sand.u32 %s43, 1
          %s222 = smul.addr %s221, 8
          %s223 = scalar_lea.vmem [#allocation2], %s222
          %s225 = ssub.s32 128, 128
          %226 = vsyncadd %s220, %s225
          %s227 = smul.addr %s28, 128
          %s228 = scalar_lea.hbm %s0, %s227
          %s230 = sshll.u32 %s223, 4
          %s231 = int_to_ptr.vmem [resolvable:$true] %s230
          %233 = dma.hbm_to_vmem [thread:$0]  %s228, 128, %s231, %s220
        $region28: #{mlp_forward.1} parent=23 // pred_fallthru
          _
      $region24: #{mlp_forward.1} parent=5 // pred_fallthru
        _
      %p234 = scmp.le.s32.totalorder 1, %s21
      %p235 = scmp.lt.s32.totalorder %s21, 3
      %p236 = pnand %p234, %p235
      %p237 = pneg %p236
      // Predicated region
      $region29: #{mlp_forward.1} parent=5 // pred_check
        _
      $region30: #{mlp_forward.1} parent=5 // pred_check_branch
        %239 = sbr.rel (%p236) target = $region32
      $region31: #{mlp_forward.1} parent=5 // pred_region
        %s240 = ssub.s32 %s21, 1
        %s241 = sand.u32 %s46, 1
        %s242 = scalar_lea.sflag [#allocation3], %s241
        %s243 = sand.u32 %s46, 1
        %s244 = smul.addr %s243, 8
        %s245 = scalar_lea.vmem [#allocation2], %s244
        // Predicated region
        $region33: #{mlp_forward.1} parent=31 // pred_check
          %p246 = pneg %p59
        $region34: #{mlp_forward.1} parent=31 // pred_check_branch
          %248 = sbr.rel (%p246) target = $region36
        $region35: #{mlp_forward.1} parent=31 // pred_region
          %249 = dma.done %s242, 128
        $region36: #{mlp_forward.1} parent=31 // pred_fallthru
          _
        // Predicated region
        $region37: #{mlp_forward.1} parent=31 // pred_check
          %p250 = pneg %p85
        $region38: #{mlp_forward.1} parent=31 // pred_check_branch
          %252 = sbr.rel (%p250) target = $region40
        $region39: #{mlp_forward.1} parent=31 // pred_region
          %253 = dma.done [#allocation6], 8192
        $region40: #{mlp_forward.1} parent=31 // pred_fallthru
          _
        // Predicated region
        $region41: #{mlp_forward.1} parent=31 // pred_check
          %p254 = pneg %p111
        $region42: #{mlp_forward.1} parent=31 // pred_check_branch
          %256 = sbr.rel (%p254) target = $region44
        $region43: #{mlp_forward.1} parent=31 // pred_region
          %257 = dma.done [#allocation6], 4096
        $region44: #{mlp_forward.1} parent=31 // pred_fallthru
          _
        %s258 = sand.u32 %s46, 1
        %s259 = scalar_lea.sflag [#allocation3], %s258
        %s260 = sand.u32 %s46, 1
        %s261 = smul.addr %s260, 8
        %s262 = scalar_lea.vmem [#allocation2], %s261
        %p263 = pneg %p59
        %p264 = pneg %p56
        %p265 = pneg %p85
        %p266 = pneg %p82
        %p267 = pneg %p111
        %p268 = pneg %p108
        %p269 = pneg %p137
        %p270 = pneg %p134
        %s271 = sand.u32 %s124, 1
        %s272 = scalar_lea.sflag [#allocation4], %s271
        %s273 = sand.u32 %s124, 1
        %s274 = smul.addr %s273, 8
        %s275 = scalar_lea.vmem [#allocation8], %s274
        %p276 = pneg %p165
        %p277 = pneg %p162
        %s278 = sand.u32 %s152, 1
        %s279 = scalar_lea.sflag [#allocation10], %s278
        %s280 = sand.u32 %s152, 1
        %s281 = smul.addr %s280, 16
        %s282 = scalar_lea.vmem [#allocation9], %s281
        %s283 = smul.u32 4, %s31
        %s284 = smul.u32 32, %s31
        %s285 = smul.u32 2, %s31
        %p286 = scmp.eq.s32.totalorder %s31, 0
        // Predicated region
        $region45: #{mlp_forward.1} parent=31 // pred_check
          %p287 = pneg %p286
        $region46: #{mlp_forward.1} parent=31 // pred_check_branch
          %289 = sbr.rel (%p287) target = $region48
        $region47: #{mlp_forward.1} parent=31 // pred_region
          %290 = vst [vmem:[%s275] sm:$0xff] 0.0
        $region48: #{mlp_forward.1} parent=31 // pred_fallthru
          _
        %v291 = vld [vmem:[%s245] sm:$0xff]
        %v292 = vld [vmem:[#allocation5] sm:$0xff]
        %v293 = vld [vmem:[#allocation5 + $0x8] sm:$0xff]
        %v294 = vld [vmem:[#allocation5 + $0x10] sm:$0xff]
        %v295 = vld [vmem:[#allocation5 + $0x18] sm:$0xff]
        %v296 = vld [vmem:[#allocation5 + $0x20] sm:$0xff]
        %v297 = vld [vmem:[#allocation5 + $0x28] sm:$0xff]
        %v298 = vld [vmem:[#allocation5 + $0x30] sm:$0xff]
        %v299 = vld [vmem:[#allocation5 + $0x38] sm:$0xff]
        %v300 = vld [vmem:[#allocation5 + $0x40] sm:$0xff]
        %v301 = vld [vmem:[#allocation5 + $0x48] sm:$0xff]
        %v302 = vld [vmem:[#allocation5 + $0x50] sm:$0xff]
        %v303 = vld [vmem:[#allocation5 + $0x58] sm:$0xff]
        %v304 = vld [vmem:[#allocation5 + $0x60] sm:$0xff]
        %v305 = vld [vmem:[#allocation5 + $0x68] sm:$0xff]
        %v306 = vld [vmem:[#allocation5 + $0x70] sm:$0xff]
        %v307 = vld [vmem:[#allocation5 + $0x78] sm:$0xff]
        %v308 = vld [vmem:[#allocation5 + $0x80] sm:$0xff]
        %v309 = vld [vmem:[#allocation5 + $0x88] sm:$0xff]
        %v310 = vld [vmem:[#allocation5 + $0x90] sm:$0xff]
        %v311 = vld [vmem:[#allocation5 + $0x98] sm:$0xff]
        %v312 = vld [vmem:[#allocation5 + $0xa0] sm:$0xff]
        %v313 = vld [vmem:[#allocation5 + $0xa8] sm:$0xff]
        %v314 = vld [vmem:[#allocation5 + $0xb0] sm:$0xff]
        %v315 = vld [vmem:[#allocation5 + $0xb8] sm:$0xff]
        %v316 = vld [vmem:[#allocation5 + $0xc0] sm:$0xff]
        %v317 = vld [vmem:[#allocation5 + $0xc8] sm:$0xff]
        %v318 = vld [vmem:[#allocation5 + $0xd0] sm:$0xff]
        %v319 = vld [vmem:[#allocation5 + $0xd8] sm:$0xff]
        %v320 = vld [vmem:[#allocation5 + $0xe0] sm:$0xff]
        %v321 = vld [vmem:[#allocation5 + $0xe8] sm:$0xff]
        %v322 = vld [vmem:[#allocation5 + $0xf0] sm:$0xff]
        %v323 = vld [vmem:[#allocation5 + $0xf8] sm:$0xff]
        %v324 = vld [vmem:[#allocation5 + $0x100] sm:$0xff]
        %v325 = vld [vmem:[#allocation5 + $0x108] sm:$0xff]
        %v326 = vld [vmem:[#allocation5 + $0x110] sm:$0xff]
        %v327 = vld [vmem:[#allocation5 + $0x118] sm:$0xff]
        %v328 = vld [vmem:[#allocation5 + $0x120] sm:$0xff]
        %v329 = vld [vmem:[#allocation5 + $0x128] sm:$0xff]
        %v330 = vld [vmem:[#allocation5 + $0x130] sm:$0xff]
        %v331 = vld [vmem:[#allocation5 + $0x138] sm:$0xff]
        %v332 = vld [vmem:[#allocation5 + $0x140] sm:$0xff]
        %v333 = vld [vmem:[#allocation5 + $0x148] sm:$0xff]
        %v334 = vld [vmem:[#allocation5 + $0x150] sm:$0xff]
        %v335 = vld [vmem:[#allocation5 + $0x158] sm:$0xff]
        %v336 = vld [vmem:[#allocation5 + $0x160] sm:$0xff]
        %v337 = vld [vmem:[#allocation5 + $0x168] sm:$0xff]
        %v338 = vld [vmem:[#allocation5 + $0x170] sm:$0xff]
        %v339 = vld [vmem:[#allocation5 + $0x178] sm:$0xff]
        %v340 = vld [vmem:[#allocation5 + $0x180] sm:$0xff]
        %v341 = vld [vmem:[#allocation5 + $0x188] sm:$0xff]
        %v342 = vld [vmem:[#allocation5 + $0x190] sm:$0xff]
        %v343 = vld [vmem:[#allocation5 + $0x198] sm:$0xff]
        %v344 = vld [vmem:[#allocation5 + $0x1a0] sm:$0xff]
        %v345 = vld [vmem:[#allocation5 + $0x1a8] sm:$0xff]
        %v346 = vld [vmem:[#allocation5 + $0x1b0] sm:$0xff]
        %v347 = vld [vmem:[#allocation5 + $0x1b8] sm:$0xff]
        %v348 = vld [vmem:[#allocation5 + $0x1c0] sm:$0xff]
        %v349 = vld [vmem:[#allocation5 + $0x1c8] sm:$0xff]
        %v350 = vld [vmem:[#allocation5 + $0x1d0] sm:$0xff]
        %v351 = vld [vmem:[#allocation5 + $0x1d8] sm:$0xff]
        %v352 = vld [vmem:[#allocation5 + $0x1e0] sm:$0xff]
        %v353 = vld [vmem:[#allocation5 + $0x1e8] sm:$0xff]
        %v354 = vld [vmem:[#allocation5 + $0x1f0] sm:$0xff]
        %v355 = vld [vmem:[#allocation5 + $0x1f8] sm:$0xff]
        %356 = vmatprep.subr.mxu0 %v293
        %357 = vmatpush1.msra.mxu0 %v292
        %358 = vmatprep.subr.mxu0 %v297
        %359 = vmatpush1.msra.mxu0 %v296
        %360 = vmatprep.subr.mxu0 %v301
        %361 = vmatpush1.msra.mxu0 %v300
        %362 = vmatprep.subr.mxu0 %v305
        %363 = vmatpush1.msra.mxu0 %v304
        %364 = vmatprep.subr.mxu0 %v309
        %365 = vmatpush1.msra.mxu0 %v308
        %366 = vmatprep.subr.mxu0 %v313
        %367 = vmatpush1.msra.mxu0 %v312
        %368 = vmatprep.subr.mxu0 %v317
        %369 = vmatpush1.msra.mxu0 %v316
        %370 = vmatprep.subr.mxu0 %v321
        %371 = vmatpush1.msra.mxu0 %v320
        %372 = vmatprep.subr.mxu0 %v325
        %373 = vmatpush1.msra.mxu0 %v324
        %374 = vmatprep.subr.mxu0 %v329
        %375 = vmatpush1.msra.mxu0 %v328
        %376 = vmatprep.subr.mxu0 %v333
        %377 = vmatpush1.msra.mxu0 %v332
        %378 = vmatprep.subr.mxu0 %v337
        %379 = vmatpush1.msra.mxu0 %v336
        %380 = vmatprep.subr.mxu0 %v341
        %381 = vmatpush1.msra.mxu0 %v340
        %382 = vmatprep.subr.mxu0 %v345
        %383 = vmatpush1.msra.mxu0 %v344
        %384 = vmatprep.subr.mxu0 %v349
        %385 = vmatpush1.msra.mxu0 %v348
        %386 = vmatprep.subr.mxu0 %v353
        %387 = vmatpush1.msra.mxu0 %v352
        %388 = vmatprep.subr.mxu0 0.0
        %389 = vmatpush1.msra.mxu0 0.0
        %390 = vmatprep.subr.mxu0 0.0
        %391 = vmatpush1.msra.mxu0 0.0
        %392 = vmatprep.subr.mxu0 0.0
        %393 = vmatpush1.msra.mxu0 0.0
        %394 = vmatprep.subr.mxu0 0.0
        %395 = vmatpush1.msra.mxu0 0.0
        %396 = vmatprep.subr.mxu0 0.0
        %397 = vmatpush1.msra.mxu0 0.0
        %398 = vmatprep.subr.mxu0 0.0
        %399 = vmatpush1.msra.mxu0 0.0
        %400 = vmatprep.subr.mxu0 0.0
        %401 = vmatpush1.msra.mxu0 0.0
        %402 = vmatprep.subr.mxu0 0.0
        %403 = vmatpush1.msra.mxu0 0.0
        %404 = vmatprep.subr.mxu0 0.0
        %405 = vmatpush1.msra.mxu0 0.0
        %406 = vmatprep.subr.mxu0 0.0
        %407 = vmatpush1.msra.mxu0 0.0
        %408 = vmatprep.subr.mxu0 0.0
        %409 = vmatpush1.msra.mxu0 0.0
        %410 = vmatprep.subr.mxu0 0.0
        %411 = vmatpush1.msra.mxu0 0.0
        %412 = vmatprep.subr.mxu0 0.0
        %413 = vmatpush1.msra.mxu0 0.0
        %414 = vmatprep.subr.mxu0 0.0
        %415 = vmatpush1.msra.mxu0 0.0
        %416 = vmatprep.subr.mxu0 0.0
        %417 = vmatpush1.msra.mxu0 0.0
        %418 = vmatprep.subr.mxu0 0.0
        %419 = vmatpush1.msra.mxu0 0.0
        %420 = vmatprep.mubr.f32.mxu0 0.0
        %421 = vmatmul.mubr.f32.gmra.mrb[0].mxu0 %v291
        %v422 = vpop.f32.mrb[0].mxu0
        %v423 = vadd.f32 0.0, %v422
        %v424 = vpop.f32.mrb[0].mxu0
        %v425 = vadd.f32 0.0, %v424
        %426 = vdwg.mxu0
        %427 = vmatprep.subr.mxu0 %v295
        %428 = vmatpush1.msra.mxu0 %v294
        %429 = vmatprep.subr.mxu0 %v299
        %430 = vmatpush1.msra.mxu0 %v298
        %431 = vmatprep.subr.mxu0 %v303
        %432 = vmatpush1.msra.mxu0 %v302
        %433 = vmatprep.subr.mxu0 %v307
        %434 = vmatpush1.msra.mxu0 %v306
        %435 = vmatprep.subr.mxu0 %v311
        %436 = vmatpush1.msra.mxu0 %v310
        %437 = vmatprep.subr.mxu0 %v315
        %438 = vmatpush1.msra.mxu0 %v314
        %439 = vmatprep.subr.mxu0 %v319
        %440 = vmatpush1.msra.mxu0 %v318
        %441 = vmatprep.subr.mxu0 %v323
        %442 = vmatpush1.msra.mxu0 %v322
        %443 = vmatprep.subr.mxu0 %v327
        %444 = vmatpush1.msra.mxu0 %v326
        %445 = vmatprep.subr.mxu0 %v331
        %446 = vmatpush1.msra.mxu0 %v330
        %447 = vmatprep.subr.mxu0 %v335
        %448 = vmatpush1.msra.mxu0 %v334
        %449 = vmatprep.subr.mxu0 %v339
        %450 = vmatpush1.msra.mxu0 %v338
        %451 = vmatprep.subr.mxu0 %v343
        %452 = vmatpush1.msra.mxu0 %v342
        %453 = vmatprep.subr.mxu0 %v347
        %454 = vmatpush1.msra.mxu0 %v346
        %455 = vmatprep.subr.mxu0 %v351
        %456 = vmatpush1.msra.mxu0 %v350
        %457 = vmatprep.subr.mxu0 %v355
        %458 = vmatpush1.msra.mxu0 %v354
        %459 = vmatprep.subr.mxu0 0.0
        %460 = vmatpush1.msra.mxu0 0.0
        %461 = vmatprep.subr.mxu0 0.0
        %462 = vmatpush1.msra.mxu0 0.0
        %463 = vmatprep.subr.mxu0 0.0
        %464 = vmatpush1.msra.mxu0 0.0
        %465 = vmatprep.subr.mxu0 0.0
        %466 = vmatpush1.msra.mxu0 0.0
        %467 = vmatprep.subr.mxu0 0.0
        %468 = vmatpush1.msra.mxu0 0.0
        %469 = vmatprep.subr.mxu0 0.0
        %470 = vmatpush1.msra.mxu0 0.0
        %471 = vmatprep.subr.mxu0 0.0
        %472 = vmatpush1.msra.mxu0 0.0
        %473 = vmatprep.subr.mxu0 0.0
        %474 = vmatpush1.msra.mxu0 0.0
        %475 = vmatprep.subr.mxu0 0.0
        %476 = vmatpush1.msra.mxu0 0.0
        %477 = vmatprep.subr.mxu0 0.0
        %478 = vmatpush1.msra.mxu0 0.0
        %479 = vmatprep.subr.mxu0 0.0
        %480 = vmatpush1.msra.mxu0 0.0
        %481 = vmatprep.subr.mxu0 0.0
        %482 = vmatpush1.msra.mxu0 0.0
        %483 = vmatprep.subr.mxu0 0.0
        %484 = vmatpush1.msra.mxu0 0.0
        %485 = vmatprep.subr.mxu0 0.0
        %486 = vmatpush1.msra.mxu0 0.0
        %487 = vmatprep.subr.mxu0 0.0
        %488 = vmatpush1.msra.mxu0 0.0
        %489 = vmatprep.subr.mxu0 0.0
        %490 = vmatpush1.msra.mxu0 0.0
        %491 = vmatprep.mubr.f32.mxu0 0.0
        %492 = vmatmul.mubr.f32.gmra.mrb[0].mxu0 %v291
        %v493 = vpop.f32.mrb[0].mxu0
        %v494 = vadd.f32 0.0, %v493
        %v495 = vpop.f32.mrb[0].mxu0
        %v496 = vadd.f32 0.0, %v495
        %497 = vdwg.mxu0
        %v498 = vxor.u32 %v423, 2147483648
        %v499 = vxor.u32 %v425, 2147483648
        %v500 = vmul.f32 %v498, 1.442695
        %v501 = vpow.pop %v500
        %v502 = vmul.f32 %v499, 1.442695
        %v503 = vpow.pop %v502
        %v504 = vadd.f32 %v501, 1.0
        %v505 = vadd.f32 %v503, 1.0
        %v506 = vrcp.pop %v504
        %v507 = vmul.f32 1.0, %v506
        %v508 = vrcp.pop %v505
        %v509 = vmul.f32 1.0, %v508
        %v510 = vmul.f32 %v423, %v507
        %v511 = vmul.f32 %v425, %v509
        %v512 = vmul.f32 %v510, %v494
        %v513 = vmul.f32 %v511, %v496
        %514 = vst [vmem:[%s282] sm:$0xff] %v512
        %515 = vst [vmem:[%s282 + $0x8] sm:$0xff] %v513
        %v516 = vld [vmem:[%s275] sm:$0xff]
        %v517 = vld [vmem:[#allocation7] sm:$0xff]
        %v518 = vld [vmem:[#allocation7 + $0x8] sm:$0xff]
        %v519 = vld [vmem:[#allocation7 + $0x10] sm:$0xff]
        %v520 = vld [vmem:[#allocation7 + $0x18] sm:$0xff]
        %v521 = vld [vmem:[#allocation7 + $0x20] sm:$0xff]
        %v522 = vld [vmem:[#allocation7 + $0x28] sm:$0xff]
        %v523 = vld [vmem:[#allocation7 + $0x30] sm:$0xff]
        %v524 = vld [vmem:[#allocation7 + $0x38] sm:$0xff]
        %v525 = vld [vmem:[#allocation7 + $0x40] sm:$0xff]
        %v526 = vld [vmem:[#allocation7 + $0x48] sm:$0xff]
        %v527 = vld [vmem:[#allocation7 + $0x50] sm:$0xff]
        %v528 = vld [vmem:[#allocation7 + $0x58] sm:$0xff]
        %v529 = vld [vmem:[#allocation7 + $0x60] sm:$0xff]
        %v530 = vld [vmem:[#allocation7 + $0x68] sm:$0xff]
        %v531 = vld [vmem:[#allocation7 + $0x70] sm:$0xff]
        %v532 = vld [vmem:[#allocation7 + $0x78] sm:$0xff]
        %v533 = vld [vmem:[#allocation7 + $0x80] sm:$0xff]
        %v534 = vld [vmem:[#allocation7 + $0x88] sm:$0xff]
        %v535 = vld [vmem:[#allocation7 + $0x90] sm:$0xff]
        %v536 = vld [vmem:[#allocation7 + $0x98] sm:$0xff]
        %v537 = vld [vmem:[#allocation7 + $0xa0] sm:$0xff]
        %v538 = vld [vmem:[#allocation7 + $0xa8] sm:$0xff]
        %v539 = vld [vmem:[#allocation7 + $0xb0] sm:$0xff]
        %v540 = vld [vmem:[#allocation7 + $0xb8] sm:$0xff]
        %v541 = vld [vmem:[#allocation7 + $0xc0] sm:$0xff]
        %v542 = vld [vmem:[#allocation7 + $0xc8] sm:$0xff]
        %v543 = vld [vmem:[#allocation7 + $0xd0] sm:$0xff]
        %v544 = vld [vmem:[#allocation7 + $0xd8] sm:$0xff]
        %v545 = vld [vmem:[#allocation7 + $0xe0] sm:$0xff]
        %v546 = vld [vmem:[#allocation7 + $0xe8] sm:$0xff]
        %v547 = vld [vmem:[#allocation7 + $0xf0] sm:$0xff]
        %v548 = vld [vmem:[#allocation7 + $0xf8] sm:$0xff]
        %549 = vmatprep.subr.mxu0 0.0
        %550 = vmatpush1.msra.mxu0 %v517
        %551 = vmatprep.subr.mxu0 0.0
        %552 = vmatpush1.msra.mxu0 %v518
        %553 = vmatprep.subr.mxu0 0.0
        %554 = vmatpush1.msra.mxu0 %v519
        %555 = vmatprep.subr.mxu0 0.0
        %556 = vmatpush1.msra.mxu0 %v520
        %557 = vmatprep.subr.mxu0 0.0
        %558 = vmatpush1.msra.mxu0 %v521
        %559 = vmatprep.subr.mxu0 0.0
        %560 = vmatpush1.msra.mxu0 %v522
        %561 = vmatprep.subr.mxu0 0.0
        %562 = vmatpush1.msra.mxu0 %v523
        %563 = vmatprep.subr.mxu0 0.0
        %564 = vmatpush1.msra.mxu0 %v524
        %565 = vmatprep.subr.mxu0 0.0
        %566 = vmatpush1.msra.mxu0 %v525
        %567 = vmatprep.subr.mxu0 0.0
        %568 = vmatpush1.msra.mxu0 %v526
        %569 = vmatprep.subr.mxu0 0.0
        %570 = vmatpush1.msra.mxu0 %v527
        %571 = vmatprep.subr.mxu0 0.0
        %572 = vmatpush1.msra.mxu0 %v528
        %573 = vmatprep.subr.mxu0 0.0
        %574 = vmatpush1.msra.mxu0 %v529
        %575 = vmatprep.subr.mxu0 0.0
        %576 = vmatpush1.msra.mxu0 %v530
        %577 = vmatprep.subr.mxu0 0.0
        %578 = vmatpush1.msra.mxu0 %v531
        %579 = vmatprep.subr.mxu0 0.0
        %580 = vmatpush1.msra.mxu0 %v532
        %581 = vmatprep.subr.mxu0 0.0
        %582 = vmatpush1.msra.mxu0 %v533
        %583 = vmatprep.subr.mxu0 0.0
        %584 = vmatpush1.msra.mxu0 %v534
        %585 = vmatprep.subr.mxu0 0.0
        %586 = vmatpush1.msra.mxu0 %v535
        %587 = vmatprep.subr.mxu0 0.0
        %588 = vmatpush1.msra.mxu0 %v536
        %589 = vmatprep.subr.mxu0 0.0
        %590 = vmatpush1.msra.mxu0 %v537
        %591 = vmatprep.subr.mxu0 0.0
        %592 = vmatpush1.msra.mxu0 %v538
        %593 = vmatprep.subr.mxu0 0.0
        %594 = vmatpush1.msra.mxu0 %v539
        %595 = vmatprep.subr.mxu0 0.0
        %596 = vmatpush1.msra.mxu0 %v540
        %597 = vmatprep.subr.mxu0 0.0
        %598 = vmatpush1.msra.mxu0 %v541
        %599 = vmatprep.subr.mxu0 0.0
        %600 = vmatpush1.msra.mxu0 %v542
        %601 = vmatprep.subr.mxu0 0.0
        %602 = vmatpush1.msra.mxu0 %v543
        %603 = vmatprep.subr.mxu0 0.0
        %604 = vmatpush1.msra.mxu0 %v544
        %605 = vmatprep.subr.mxu0 0.0
        %606 = vmatpush1.msra.mxu0 %v545
        %607 = vmatprep.subr.mxu0 0.0
        %608 = vmatpush1.msra.mxu0 %v546
        %609 = vmatprep.subr.mxu0 0.0
        %610 = vmatpush1.msra.mxu0 %v547
        %611 = vmatprep.subr.mxu0 0.0
        %612 = vmatpush1.msra.mxu0 %v548
        %613 = vmatprep.mubr.f32.mxu0 %v513
        %614 = vmatmul.mubr.f32.gmra.mrb[0].mxu0 %v512
        %v615 = vpop.f32.mrb[0].mxu0
        %v616 = vadd.f32 0.0, %v615
        %v617 = vpop.f32.mrb[0].mxu0
        %618 = vdwg.mxu0
        %v619 = vadd.f32 %v516, %v616
        %620 = vst [vmem:[%s275] sm:$0xff] %v619
        %s621 = sand.u32 %s124, 1
        %s622 = scalar_lea.sflag [#allocation4], %s621
        %s623 = sand.u32 %s124, 1
        %s624 = smul.addr %s623, 8
        %s625 = scalar_lea.vmem [#allocation8], %s624
        %s626 = sand.u32 %s152, 1
        %s627 = scalar_lea.sflag [#allocation10], %s626
        %s628 = sand.u32 %s152, 1
        %s629 = smul.addr %s628, 16
        %s630 = scalar_lea.vmem [#allocation9], %s629
        // Predicated region
        $region49: #{mlp_forward.1} parent=31 // pred_check
          %p631 = pneg %p134
        $region50: #{mlp_forward.1} parent=31 // pred_check_branch
          %633 = sbr.rel (%p631) target = $region52
        $region51: #{mlp_forward.1} parent=31 // pred_region
          %s635 = ssub.s32 128, 128
          %636 = vsyncadd %s622, %s635
          %s637 = smul.addr %s30, 128
          %s638 = scalar_lea.hbm %s3, %s637
          %s640 = sshll.u32 %s625, 4
          %s641 = int_to_ptr.vmem [resolvable:$true] %s640
          %643 = dma.vmem_to_hbm [thread:$0]  %s641, 128, %s638, %s622
        $region52: #{mlp_forward.1} parent=31 // pred_fallthru
          _
        // Predicated region
        $region53: #{mlp_forward.1} parent=31 // pred_check
          %p644 = pneg %p162
        $region54: #{mlp_forward.1} parent=31 // pred_check_branch
          %646 = sbr.rel (%p644) target = $region56
        $region55: #{mlp_forward.1} parent=31 // pred_region
          %s647 = smul.u32 2, %s31
          %s649 = ssub.s32 256, 256
          %650 = vsyncadd %s627, %s649
          %s651 = smul.addr %s30, 2
          %s652 = sadd.s32 %s647, %s651
          %s653 = smul.addr %s652, 128
          %s654 = scalar_lea.hbm %s4, %s653
          %s656 = sshll.u32 %s630, 4
          %s657 = int_to_ptr.vmem [resolvable:$true] %s656
          %659 = dma.vmem_to_hbm [thread:$0]  %s657, 256, %s654, %s627
        $region56: #{mlp_forward.1} parent=31 // pred_fallthru
          _
      $region32: #{mlp_forward.1} parent=5 // pred_fallthru
        _
      %p660 = scmp.le.s32.totalorder 2, %s21
      // Predicated region
      $region57: #{mlp_forward.1} parent=5 // pred_check
        %p661 = pneg %p660
      $region58: #{mlp_forward.1} parent=5 // pred_check_branch
        %663 = sbr.rel (%p661) target = $region60
      $region59: #{mlp_forward.1} parent=5 // pred_region
        %s664 = ssub.s32 %s21, 2
        // Predicated region
        $region61: #{mlp_forward.1} parent=59 // pred_check
          %p665 = pneg %p140
        $region62: #{mlp_forward.1} parent=59 // pred_check_branch
          %667 = sbr.rel (%p665) target = $region64
        $region63: #{mlp_forward.1} parent=59 // pred_region
          %s668 = sand.u32 %s125, 1
          %s669 = scalar_lea.sflag [#allocation4], %s668
          %s670 = sand.u32 %s125, 1
          %s671 = smul.addr %s670, 8
          %s672 = scalar_lea.vmem [#allocation8], %s671
          %673 = dma.done %s669, 128
        $region64: #{mlp_forward.1} parent=59 // pred_fallthru
          _
        // Predicated region
        $region65: #{mlp_forward.1} parent=59 // pred_check
          %p674 = pneg %p168
        $region66: #{mlp_forward.1} parent=59 // pred_check_branch
          %676 = sbr.rel (%p674) target = $region68
        $region67: #{mlp_forward.1} parent=59 // pred_region
          %s677 = sand.u32 %s153, 1
          %s678 = scalar_lea.sflag [#allocation10], %s677
          %s679 = sand.u32 %s153, 1
          %s680 = smul.addr %s679, 16
          %s681 = scalar_lea.vmem [#allocation9], %s680
          %682 = dma.done %s678, 256
        $region68: #{mlp_forward.1} parent=59 // pred_fallthru
          _
      $region60: #{mlp_forward.1} parent=5 // pred_fallthru
        _
    $region6: #{mlp_forward.1} parent=1 // loop_footer
      %s25 = sadd.s32 1, %s21
    $region7: #{mlp_forward.1} parent=1 // loop_footer_branch
      %20 = sbr.rel target = $region3
    $region8: #{mlp_forward.1} parent=1 // loop_exit
      _
    %683 = vsyncpa [#allocation3], 1
    %s684 = scalar_lea.sflag [#allocation3], 1
    %685 = vsyncpa %s684, 1
    %686 = vsyncpa [#allocation6], 1
    %687 = vsyncpa [#allocation4], 1
    %s688 = scalar_lea.sflag [#allocation4], 1
    %689 = vsyncpa %s688, 1
    %690 = vsyncpa [#allocation10], 1
    %s691 = scalar_lea.sflag [#allocation10], 1
    %692 = vsyncpa %s691, 1

</llo_original>
